<compile_context>
chip_gen: v6e
topology: v6e:2x2x1
jax: 0.10.0
libtpu: 0.0.40
codegen_flags: <defaults>
</compile_context>

<pallas_src>
import functools

import jax
import jax.numpy as jnp
from jax import lax
from jax.experimental import pallas as pl
from jax.experimental.pallas import tpu as pltpu


def _complex_conv_kernel(pr_ref, pi_ref, wa_ref, wb_ref, o_ref):
    """One M-tile of the packed complex im2col matmul.

    pr_ref/pi_ref: (tmf, Kf)  folded real/imag patches (bf16)
    wa_ref/wb_ref: (Kf, Nf)   block-diagonal packed weights (bf16)
    o_ref:         (tmf, Nf)  folded packed [real|imag] output (f32), 128-lane dense
    """
    acc = jnp.dot(pr_ref[...], wa_ref[...], preferred_element_type=jnp.float32)
    acc = acc + jnp.dot(pi_ref[...], wb_ref[...], preferred_element_type=jnp.float32)
    o_ref[...] = acc.astype(o_ref.dtype)


def _round_up(x, m):
    return ((x + m - 1) // m) * m


def _im2col_nhwc(x_nhwc, kh, kw, stride, padding):
    """Plain-JAX glue: extract conv patches. Returns (M, KH*KW*C), Ho, Wo."""
    B, H, W, C = x_nhwc.shape
    xp = jnp.pad(x_nhwc, ((0, 0), (padding, padding), (padding, padding), (0, 0)))
    Ho = (H + 2 * padding - kh) // stride + 1
    Wo = (W + 2 * padding - kw) // stride + 1
    cols = []
    for i in range(kh):
        for j in range(kw):
            cols.append(
                xp[:, i : i + stride * Ho : stride, j : j + stride * Wo : stride, :]
            )
    # TODO(synk): fuse patch extraction into the kernel (halo'd BlockSpec windows
    # over NHWC input) to remove the kh*kw HBM read amplification of im2col.
    # (B, Ho, Wo, KH*KW, C) with (kh, kw) ordering matching the weight reshape
    patches = jnp.stack(cols, axis=3)
    return patches.reshape(B * Ho * Wo, kh * kw * C), Ho, Wo


def _block_diag(w, r):
    """(K, N) -> (r*K, r*N) block-diagonal with r copies of w."""
    K, N = w.shape
    eye = jnp.eye(r, dtype=w.dtype)
    return (eye[:, None, :, None] * w[None, :, None, :]).reshape(r * K, r * N)


def _pick_tile_m(M, r, k_fold, n_fold):
    """Largest M tile (in un-folded rows) fitting a conservative VMEM budget,
    preferring >= 2 grid steps so both v7x TensorCores get work."""
    budget = 16 * 1024 * 1024  # conservative vs the 32 MiB scoped default (v7x: 64 MiB total)
    candidates = [t for t in (1024, 512, 256, 128) if t % (8 * r) == 0]
    if not candidates:
        candidates = [8 * r]
    k_lanes = _round_up(k_fold, 128)
    n_lanes = _round_up(n_fold, 128)
    fitting = []
    for tm in candidates:
        tmf = tm // r
        # 2 patch streams x 2 pipeline buffers (bf16) + output x 2 buffers (f32)
        # + 2 resident weight blocks (bf16)
        need = (2 * 2 * tmf * k_lanes * 2
                + 2 * tmf * n_lanes * 4
                + 2 * k_lanes * n_lanes * 2)
        if need <= budget:
            fitting.append(tm)
    if not fitting:
        fitting = [candidates[-1]]
    for tm in fitting:  # descending: largest tile that still gives >= 2 grid steps
        if pl.cdiv(M, tm) >= 2:
            return tm
    return fitting[-1]  # tiny M: smallest fitting tile to minimize padding


@functools.partial(jax.jit, static_argnames=("kernel_size", "stride", "padding"))
def complex_conv2d(x_complex, w_r, w_i, *, kernel_size, stride, padding):
    """x_complex: complex64 NCHW (B, Cin, H, W)  (PyTorch convention).
    w_r, w_i:     float32 (Cout, Cin, KH, KW)   (PyTorch conv weight layout).
    Returns complex64 NCHW (B, Cout, Ho, Wo).
    """
    kh = kw = kernel_size
    B, Cin, H, W = x_complex.shape
    Cout = w_r.shape[0]
    K = kh * kw * Cin
    Nc = 2 * Cout

    # ---- operand prep (bf16 MXU feeds, f32 accumulation in-kernel)
    xr = jnp.transpose(jnp.real(x_complex), (0, 2, 3, 1)).astype(jnp.bfloat16)
    xi = jnp.transpose(jnp.imag(x_complex), (0, 2, 3, 1)).astype(jnp.bfloat16)
    pr, Ho, Wo = _im2col_nhwc(xr, kh, kw, stride, padding)
    pi, _, _ = _im2col_nhwc(xi, kh, kw, stride, padding)
    M = B * Ho * Wo

    # (Cout, Cin, KH, KW) -> (KH, KW, Cin, Cout) -> (K, Cout), packed [real|imag]
    wr2 = jnp.transpose(w_r, (2, 3, 1, 0)).reshape(K, Cout).astype(jnp.bfloat16)
    wi2 = jnp.transpose(w_i, (2, 3, 1, 0)).reshape(K, Cout).astype(jnp.bfloat16)
    wa = jnp.concatenate([wr2, wi2], axis=1)    # contribution of Pr -> [real | imag]
    wb = jnp.concatenate([-wi2, wr2], axis=1)   # contribution of Pi -> [real | imag]

    # ---- lane-dense packing: fold r rows of M so the output tile is 128 lanes wide
    if Nc >= 128:
        nc_pad = _round_up(Nc, 128)
        r = 1
    else:
        nc_pad = 1 << (Nc - 1).bit_length()     # next power of two (divides 128)
        r = 128 // nc_pad
    if nc_pad != Nc:
        wa = jnp.pad(wa, ((0, 0), (0, nc_pad - Nc)))
        wb = jnp.pad(wb, ((0, 0), (0, nc_pad - Nc)))
    wa_bd = _block_diag(wa, r)                  # (Kf, Nf)
    wb_bd = _block_diag(wb, r)
    Kf, Nf = r * K, r * nc_pad

    tm = _pick_tile_m(M, r, Kf, Nf)
    Mp = pl.cdiv(M, tm) * tm                    # pad M to a tile multiple (no tm=M fallback)
    if Mp != M:
        pr = jnp.pad(pr, ((0, Mp - M), (0, 0)))
        pi = jnp.pad(pi, ((0, Mp - M), (0, 0)))
    Mf, tmf = Mp // r, tm // r
    pr_f = pr.reshape(Mf, Kf)                   # contiguous row-major fold: free
    pi_f = pi.reshape(Mf, Kf)

    grid = (Mf // tmf,)
    cost = pl.CostEstimate(
        flops=2 * 2 * Mf * Kf * Nf,             # two MXU matmuls per tile, whole grid
        transcendentals=0,
        bytes_accessed=(2 * Mf * Kf + 2 * Kf * Nf) * 2 + Mf * Nf * 4,
    )

    out_f = pl.pallas_call(
        _complex_conv_kernel,
        out_shape=jax.ShapeDtypeStruct((Mf, Nf), jnp.float32),
        grid_spec=pltpu.PrefetchScalarGridSpec(
            num_scalar_prefetch=0,
            grid=grid,
            in_specs=[
                pl.BlockSpec((tmf, Kf), lambda m: (m, 0)),
                pl.BlockSpec((tmf, Kf), lambda m: (m, 0)),
                pl.BlockSpec((Kf, Nf), lambda m: (0, 0)),   # weights resident
                pl.BlockSpec((Kf, Nf), lambda m: (0, 0)),
            ],
            out_specs=pl.BlockSpec((tmf, Nf), lambda m: (m, 0)),
        ),
        compiler_params=pltpu.CompilerParams(
            dimension_semantics=("parallel",),
        ),
        cost_estimate=cost,
    )(pr_f, pi_f, wa_bd, wb_bd)

    # ---- unpack: (Mf, Nf) -> (Mp, nc_pad) -> (M, 2*Cout) -> NCHW complex
    out2 = out_f.reshape(Mp, nc_pad)[:M, :Nc]
    out_r = jnp.transpose(out2[:, :Cout].reshape(B, Ho, Wo, Cout), (0, 3, 1, 2))
    out_i = jnp.transpose(out2[:, Cout:].reshape(B, Ho, Wo, Cout), (0, 3, 1, 2))
    return lax.complex(out_r, out_i)


def _reference_complex_conv2d(x_complex, w_r, w_i, *, stride, padding):
    """Pure-JAX NCHW reference mirroring the PyTorch module."""
    dn = lax.conv_dimension_numbers(
        x_complex.real.shape, w_r.shape, ("NCHW", "OIHW", "NCHW")
    )
    conv = lambda x, w: lax.conv_general_dilated(
        x, w, (stride, stride), [(padding, padding)] * 2,
        dimension_numbers=dn, precision=lax.Precision.HIGHEST,
    )
    xr = jnp.real(x_complex).astype(jnp.float32)
    xi = jnp.imag(x_complex).astype(jnp.float32)
    real_out = conv(xr, w_r) - conv(xi, w_i)
    imag_out = conv(xi, w_r) + conv(xr, w_i)
    return lax.complex(real_out, imag_out)


if __name__ == "__main__":
    # Module config: ComplexConv2d(in_channels=4, out_channels=8, kernel_size=3,
    # stride=1, padding=1)
    B, Cin, H, W = 2, 4, 16, 16
    Cout, ksize, stride, padding = 8, 3, 1, 1

    key = jax.random.PRNGKey(0)
    k_xr, k_xi, k_wr, k_wi = jax.random.split(key, 4)

    x = lax.complex(
        jax.random.normal(k_xr, (B, Cin, H, W), dtype=jnp.float32),
        jax.random.normal(k_xi, (B, Cin, H, W), dtype=jnp.float32),
    )
    fan_in = Cin * ksize * ksize
    scale = 1.0 / (fan_in ** 0.5)
    w_r = scale * jax.random.normal(k_wr, (Cout, Cin, ksize, ksize), dtype=jnp.float32)
    w_i = scale * jax.random.normal(k_wi, (Cout, Cin, ksize, ksize), dtype=jnp.float32)

    out = complex_conv2d(x, w_r, w_i, kernel_size=ksize, stride=stride, padding=padding)
    out = jax.block_until_ready(out)
    assert out.shape == (B, Cout, H, W) and out.dtype == jnp.complex64

    # Tight check vs a reference fed the same bf16-rounded operands
    # (kernel uses bf16 MXU feeds with f32 accumulation).
    q = lambda a: a.astype(jnp.bfloat16).astype(jnp.float32)
    x_q = lax.complex(q(jnp.real(x)), q(jnp.imag(x)))
    ref_q = _reference_complex_conv2d(x_q, q(w_r), q(w_i), stride=stride, padding=padding)
    assert jnp.allclose(out.real, ref_q.real, atol=1e-3, rtol=1e-3)
    assert jnp.allclose(out.imag, ref_q.imag, atol=1e-3, rtol=1e-3)

    # Loose sanity check vs the full-f32 module semantics.
    ref = _reference_complex_conv2d(x, w_r, w_i, stride=stride, padding=padding)
    assert jnp.allclose(out.real, ref.real, atol=5e-2, rtol=5e-2)
    assert jnp.allclose(out.imag, ref.imag, atol=5e-2, rtol=5e-2)

    print("KERNEL_OK")
</pallas_src>

<mosaic_0001>
module attributes {stable_mosaic.version = 11 : i64} {
  func.func @_complex_conv_kernel(%arg0: i32, %arg1: memref<32x288xbf16, #tpu.memory_space<vmem>>, %arg2: memref<32x288xbf16, #tpu.memory_space<vmem>>, %arg3: memref<288x128xbf16, #tpu.memory_space<vmem>>, %arg4: memref<288x128xbf16, #tpu.memory_space<vmem>>, %arg5: memref<32x128xf32, #tpu.memory_space<vmem>>) attributes {dimension_semantics = [#tpu.dimension_semantics<parallel>], iteration_bounds = array<i64: 2>, scalar_prefetch = 0 : i64, scratch_operands = 0 : i64, tpu.core_type = #tpu.core_type<tc>, window_params = [{transform_indices = @transform_0, window_bounds = array<i64: 32, 288>}, {transform_indices = @transform_1, window_bounds = array<i64: 32, 288>}, {pipeline_mode = #tpu.pipeline_mode<synchronous>, transform_indices = @transform_2, window_bounds = array<i64: 288, 128>}, {pipeline_mode = #tpu.pipeline_mode<synchronous>, transform_indices = @transform_3, window_bounds = array<i64: 288, 128>}, {transform_indices = @transform_4, window_bounds = array<i64: 32, 128>}]} {
    %c0 = arith.constant 0 : index
    %c0_0 = arith.constant 0 : index
    %0 = vector.load %arg1[%c0, %c0_0] : memref<32x288xbf16, #tpu.memory_space<vmem>>, vector<32x288xbf16>
    %c0_1 = arith.constant 0 : index
    %c0_2 = arith.constant 0 : index
    %1 = vector.load %arg3[%c0_1, %c0_2] : memref<288x128xbf16, #tpu.memory_space<vmem>>, vector<288x128xbf16>
    %cst = arith.constant dense<0.000000e+00> : vector<32x128xf32>
    %2 = tpu.matmul %0, %1, %cst {dimension_numbers = #tpu.dot_dimension_numbers<[1], [0], [0], [1], [0, 0, 1, 1], [], []>} : vector<32x288xbf16>, vector<288x128xbf16>, vector<32x128xf32> -> vector<32x128xf32>
    %c0_3 = arith.constant 0 : index
    %c0_4 = arith.constant 0 : index
    %3 = vector.load %arg2[%c0_3, %c0_4] : memref<32x288xbf16, #tpu.memory_space<vmem>>, vector<32x288xbf16>
    %c0_5 = arith.constant 0 : index
    %c0_6 = arith.constant 0 : index
    %4 = vector.load %arg4[%c0_5, %c0_6] : memref<288x128xbf16, #tpu.memory_space<vmem>>, vector<288x128xbf16>
    %cst_7 = arith.constant dense<0.000000e+00> : vector<32x128xf32>
    %5 = tpu.matmul %3, %4, %cst_7 {dimension_numbers = #tpu.dot_dimension_numbers<[1], [0], [0], [1], [0, 0, 1, 1], [], []>} : vector<32x288xbf16>, vector<288x128xbf16>, vector<32x128xf32> -> vector<32x128xf32>
    %6 = arith.addf %2, %5 : vector<32x128xf32>
    %c0_8 = arith.constant 0 : index
    %c0_9 = arith.constant 0 : index
    %7 = vector.load %arg5[%c0_8, %c0_9] : memref<32x128xf32, #tpu.memory_space<vmem>>, vector<32x128xf32>
    tpu.vector_store %arg5[%c0_8, %c0_9], %6 {strides = array<i32>} : memref<32x128xf32, #tpu.memory_space<vmem>>, vector<32x128xf32>,
    return
  }
  func.func @transform_0(%arg0: i32) -> (i32, i32) {
    %c0_i32 = arith.constant 0 : i32
    %c0_i32_0 = arith.constant 0 : i32
    return %arg0, %c0_i32 : i32, i32
  }
  func.func @transform_1(%arg0: i32) -> (i32, i32) {
    %c0_i32 = arith.constant 0 : i32
    %c0_i32_0 = arith.constant 0 : i32
    return %arg0, %c0_i32 : i32, i32
  }
  func.func @transform_2(%arg0: i32) -> (i32, i32) {
    %c0_i32 = arith.constant 0 : i32
    %c0_i32_0 = arith.constant 0 : i32
    %c0_i32_1 = arith.constant 0 : i32
    return %c0_i32, %c0_i32_0 : i32, i32
  }
  func.func @transform_3(%arg0: i32) -> (i32, i32) {
    %c0_i32 = arith.constant 0 : i32
    %c0_i32_0 = arith.constant 0 : i32
    %c0_i32_1 = arith.constant 0 : i32
    return %c0_i32, %c0_i32_0 : i32, i32
  }
  func.func @transform_4(%arg0: i32) -> (i32, i32) {
    %c0_i32 = arith.constant 0 : i32
    %c0_i32_0 = arith.constant 0 : i32
    return %arg0, %c0_i32 : i32, i32
  }
}

</mosaic_0001>

<llo_original>
// kernel: custom-call.1
$region0: #{custom-call.1}
  %s0 = inlined_call_operand.hbm [shape: c64[2,4,16,16], index: 0, kind: input, shape index: {}]
  %s1 = inlined_call_operand.vmem [shape: f32[2,4,16,16], index: 1, kind: output, shape index: {}]
  %s2 = scalar_lea.hbm %s0, 2048
  $region1: #{custom-call.1} parent=0
    #allocation0 [shape = 's32[1]{0}', space=sflag, size = 0x4, scoped, tag = 'scoped memory for custom-call.1']
    %3 = vsyncpa [#allocation0], 0
    %s4 = sshll.u32 %s1, 4
    %s5 = int_to_ptr.vmem [resolvable:$true] %s4
    %7 = dma.hbm_to_vmem [thread:$0]  %s2, 2048, %s5, [#allocation0]
    %8 = dma.done [#allocation0], 2048
    %9 = vsyncpa [#allocation0], 1

// kernel: custom-call
$region0: #{custom-call}
  %s0 = inlined_call_operand.hbm [shape: c64[2,4,16,16], index: 0, kind: input, shape index: {}]
  %s1 = inlined_call_operand.vmem [shape: f32[2,4,16,16], index: 1, kind: output, shape index: {}]
  $region1: #{custom-call} parent=0
    #allocation0 [shape = 's32[1]{0}', space=sflag, size = 0x4, scoped, tag = 'scoped memory for custom-call']
    %2 = vsyncpa [#allocation0], 0
    %s3 = sshll.u32 %s1, 4
    %s4 = int_to_ptr.vmem [resolvable:$true] %s3
    %6 = dma.hbm_to_vmem [thread:$0]  %s0, 2048, %s4, [#allocation0]
    %7 = dma.done [#allocation0], 2048
    %8 = vsyncpa [#allocation0], 1

// kernel: neg.1
$region0: #{neg.1}
  #allocation0 [shape = 's32[1]{0}', space=sflag, size = 0x4, scoped, tag = 'scoped memory for neg.1']
  %s0 = inlined_call_operand.vmem [shape: bf16[36,8], index: 0, kind: input, shape index: {}]
  %s1 = inlined_call_operand.vmem [shape: bf16[36,8], index: 1, kind: output, shape index: {}]
  %v2 = vld [vmem:[%s0] sm:$0xf]
  %v3 = vunpack.c.l.bf16 %v2
  %v4 = vunpack.c.h.bf16 %v2
  %5 = xla_tuple %v3
  %6 = xla_tuple %5
  %v7 = vxor.u32 %v3, 2147483648
  %8 = xla_tuple %v7
  %v9 = vpack.c.bf16 0.0, %v7
  %10 = vst [vmem:[%s1] sm:$0xf] %v9
  %s11 = scalar_lea.vmem %s0, 4
  %v12 = vld [vmem:[%s11] sm:$0xf]
  %v13 = vunpack.c.l.bf16 %v12
  %v14 = vunpack.c.h.bf16 %v12
  %15 = xla_tuple %v13
  %16 = xla_tuple %15
  %v17 = vxor.u32 %v13, 2147483648
  %18 = xla_tuple %v17
  %s19 = scalar_lea.vmem %s1, 4
  %v20 = vpack.c.bf16 0.0, %v17
  %21 = vst [vmem:[%s19] sm:$0xf] %v20
  %s22 = scalar_lea.vmem %s0, 8
  %v23 = vld [vmem:[%s22] sm:$0xf]
  %v24 = vunpack.c.l.bf16 %v23
  %v25 = vunpack.c.h.bf16 %v23
  %26 = xla_tuple %v24
  %27 = xla_tuple %26
  %v28 = vxor.u32 %v24, 2147483648
  %29 = xla_tuple %v28
  %s30 = scalar_lea.vmem %s1, 8
  %v31 = vpack.c.bf16 0.0, %v28
  %32 = vst [vmem:[%s30] sm:$0xf] %v31
  %s33 = scalar_lea.vmem %s0, 12
  %v34 = vld [vmem:[%s33] sm:$0xf]
  %v35 = vunpack.c.l.bf16 %v34
  %v36 = vunpack.c.h.bf16 %v34
  %37 = xla_tuple %v35
  %38 = xla_tuple %37
  %v39 = vxor.u32 %v35, 2147483648
  %40 = xla_tuple %v39
  %s41 = scalar_lea.vmem %s1, 12
  %v42 = vpack.c.bf16 0.0, %v39
  %43 = vst [vmem:[%s41] sm:$0xf] %v42
  %s44 = scalar_lea.vmem %s0, 16
  %v45 = vld [vmem:[%s44] sm:$0xf]
  %v46 = vunpack.c.l.bf16 %v45
  %v47 = vunpack.c.h.bf16 %v45
  %48 = xla_tuple %v46
  %49 = xla_tuple %48
  %v50 = vxor.u32 %v46, 2147483648
  %51 = xla_tuple %v50
  %s52 = scalar_lea.vmem %s1, 16
  %v53 = vpack.c.bf16 0.0, %v50
  %54 = vst [vmem:[%s52] sm:$0xf] %v53

// kernel: complex_conv2d.1
$region0: #{complex_conv2d.1}
  #allocation0 [shape = 'u32[]', space=smem, size = 0x4, offset = 0x4, fixed_abs, tag = 'smem constant byte address 0x4 - core index']
  #allocation1 [shape = 'u32[144,128]{1,0:T(1,128)}', space=vmem, size = 0x12000, scoped, tag = 'internal scratch']
  %s0 = inlined_call_operand.vmem [shape: bf16[64,288], index: 0, kind: input, shape index: {}]
  %s1 = inlined_call_operand.vmem [shape: bf16[64,288], index: 1, kind: input, shape index: {}]
  %s2 = inlined_call_operand.vmem [shape: bf16[288,128], index: 2, kind: input, shape index: {}]
  %s3 = inlined_call_operand.vmem [shape: bf16[288,128], index: 3, kind: input, shape index: {}]
  %s4 = inlined_call_operand.vmem [shape: f32[64,128], index: 4, kind: output, shape index: {}]
  %s5 = sld [smem:[#allocation0]]
  $region49: #{complex_conv2d.1} parent=0
    _
  %s7 = ssub.s32 1, %s5
  %s8 = scalar_select 0, %s7, %s5
  loop: start=0, step=1, limit=4
  $region2: #{complex_conv2d.1} parent=0 // loop_pre_header
    _
  $region3: #{complex_conv2d.1} parent=0 // loop_header
    %s10 = sphi 0, %s14
    %p11 = scmp.ge.s32.totalorder %s10, 4
    %s20 = sphi 0, %s22
    %s23 = sphi 0, %s20
    %s24 = sphi 0, %s23
    %s40 = sphi 0, %s24
    %s46 = sphi 0, %s48
    %s49 = sphi 0, %s46
    %s50 = sphi 0, %s49
    %s66 = sphi 0, %s50
    %s70 = sphi 0, %s70
    %s72 = sphi 0, %s70
    %s73 = sphi 0, %s72
    %s87 = sphi 0, %s73
    %s91 = sphi 0, %s91
    %s93 = sphi 0, %s91
    %s94 = sphi 0, %s93
    %s108 = sphi 0, %s94
    %s114 = sphi 0, %s116
    %s117 = sphi 0, %s114
    %s118 = sphi 0, %s117
    %s134 = sphi 0, %s118
  $region4: #{complex_conv2d.1} parent=0 // loop_header_branch
    %13 = sbr.rel (%p11) target = $region8
  $region5: #{complex_conv2d.1} parent=0 // loop_body
    %s15 = ssub.s32 %s10, 1
    %s16 = ssub.s32 %s10, 2
    %s17 = sadd.s32 %s10, 1
    %s18 = ssub.s32 %s10, %s17
    %p19 = scmp.eq.s32.totalorder %s18, 0
    %s21 = sadd.s32 %s20, 1
    %s22 = scalar_select %p19, %s20, %s21
    %p25 = pneg %p19
    %p26 = scmp.eq.s32.totalorder %s10, 1
    %p27 = por %p25, %p26
    %p28 = scmp.ne.s32.totalorder %s20, %s23
    %p29 = scmp.eq.s32.totalorder %s10, 0
    %p30 = por %p28, %p29
    %p31 = scmp.ne.s32.totalorder %s20, %s23
    %p32 = scmp.eq.s32.totalorder %s15, 1
    %p33 = por %p31, %p32
    %p34 = scmp.ne.s32.totalorder %s23, %s24
    %p35 = scmp.eq.s32.totalorder %s15, 0
    %p36 = por %p34, %p35
    %p37 = scmp.ne.s32.totalorder %s23, %s24
    %p38 = scmp.eq.s32.totalorder %s16, 1
    %p39 = por %p37, %p38
    %p41 = scmp.ne.s32.totalorder %s24, %s40
    %p42 = scmp.eq.s32.totalorder %s16, 0
    %p43 = por %p41, %p42
    %s44 = ssub.s32 %s10, %s17
    %p45 = scmp.eq.s32.totalorder %s44, 0
    %s47 = sadd.s32 %s46, 1
    %s48 = scalar_select %p45, %s46, %s47
    %p51 = pneg %p45
    %p52 = scmp.eq.s32.totalorder %s10, 1
    %p53 = por %p51, %p52
    %p54 = scmp.ne.s32.totalorder %s46, %s49
    %p55 = scmp.eq.s32.totalorder %s10, 0
    %p56 = por %p54, %p55
    %p57 = scmp.ne.s32.totalorder %s46, %s49
    %p58 = scmp.eq.s32.totalorder %s15, 1
    %p59 = por %p57, %p58
    %p60 = scmp.ne.s32.totalorder %s49, %s50
    %p61 = scmp.eq.s32.totalorder %s15, 0
    %p62 = por %p60, %p61
    %p63 = scmp.ne.s32.totalorder %s49, %s50
    %p64 = scmp.eq.s32.totalorder %s16, 1
    %p65 = por %p63, %p64
    %p67 = scmp.ne.s32.totalorder %s50, %s66
    %p68 = scmp.eq.s32.totalorder %s16, 0
    %p69 = por %p67, %p68
    %s71 = sadd.s32 %s70, 1
    %p74 = scmp.eq.s32.totalorder %s10, 1
    %p75 = scmp.ne.s32.totalorder %s70, %s72
    %p76 = scmp.eq.s32.totalorder %s10, 0
    %p77 = por %p75, %p76
    %p78 = scmp.ne.s32.totalorder %s70, %s72
    %p79 = scmp.eq.s32.totalorder %s15, 1
    %p80 = por %p78, %p79
    %p81 = scmp.ne.s32.totalorder %s72, %s73
    %p82 = scmp.eq.s32.totalorder %s15, 0
    %p83 = por %p81, %p82
    %p84 = scmp.ne.s32.totalorder %s72, %s73
    %p85 = scmp.eq.s32.totalorder %s16, 1
    %p86 = por %p84, %p85
    %p88 = scmp.ne.s32.totalorder %s73, %s87
    %p89 = scmp.eq.s32.totalorder %s16, 0
    %p90 = por %p88, %p89
    %s92 = sadd.s32 %s91, 1
    %p95 = scmp.eq.s32.totalorder %s10, 1
    %p96 = scmp.ne.s32.totalorder %s91, %s93
    %p97 = scmp.eq.s32.totalorder %s10, 0
    %p98 = por %p96, %p97
    %p99 = scmp.ne.s32.totalorder %s91, %s93
    %p100 = scmp.eq.s32.totalorder %s15, 1
    %p101 = por %p99, %p100
    %p102 = scmp.ne.s32.totalorder %s93, %s94
    %p103 = scmp.eq.s32.totalorder %s15, 0
    %p104 = por %p102, %p103
    %p105 = scmp.ne.s32.totalorder %s93, %s94
    %p106 = scmp.eq.s32.totalorder %s16, 1
    %p107 = por %p105, %p106
    %p109 = scmp.ne.s32.totalorder %s94, %s108
    %p110 = scmp.eq.s32.totalorder %s16, 0
    %p111 = por %p109, %p110
    %s112 = ssub.s32 %s10, %s17
    %p113 = scmp.eq.s32.totalorder %s112, 0
    %s115 = sadd.s32 %s114, 1
    %s116 = scalar_select %p113, %s114, %s115
    %p119 = pneg %p113
    %p120 = scmp.eq.s32.totalorder %s10, 1
    %p121 = por %p119, %p120
    %p122 = scmp.ne.s32.totalorder %s114, %s117
    %p123 = scmp.eq.s32.totalorder %s10, 0
    %p124 = por %p122, %p123
    %p125 = scmp.ne.s32.totalorder %s114, %s117
    %p126 = scmp.eq.s32.totalorder %s15, 1
    %p127 = por %p125, %p126
    %p128 = scmp.ne.s32.totalorder %s117, %s118
    %p129 = scmp.eq.s32.totalorder %s15, 0
    %p130 = por %p128, %p129
    %p131 = scmp.ne.s32.totalorder %s117, %s118
    %p132 = scmp.eq.s32.totalorder %s16, 1
    %p133 = por %p131, %p132
    %p135 = scmp.ne.s32.totalorder %s118, %s134
    %p136 = scmp.eq.s32.totalorder %s16, 0
    %p137 = por %p135, %p136
    %p138 = scmp.le.s32.totalorder 1, %s10
    %p139 = scmp.lt.s32.totalorder %s10, 3
    %p140 = pnand %p138, %p139
    %p141 = pneg %p140
    // Predicated region
    $region9: #{complex_conv2d.1} parent=5 // pred_check
      _
    $region10: #{complex_conv2d.1} parent=5 // pred_check_branch
      %143 = sbr.rel (%p140) target = $region12
    $region11: #{complex_conv2d.1} parent=5 // pred_region
      %s144 = ssub.s32 %s10, 1
      // Predicated region
      $region13: #{complex_conv2d.1} parent=11 // pred_check
        %p145 = pneg %p83
      $region14: #{complex_conv2d.1} parent=11 // pred_check_branch
        %147 = sbr.rel (%p145) target = $region16
      $region15: #{complex_conv2d.1} parent=11 // pred_region
        _
      $region16: #{complex_conv2d.1} parent=11 // pred_fallthru
        _
      // Predicated region
      $region17: #{complex_conv2d.1} parent=11 // pred_check
        %p148 = pneg %p104
      $region18: #{complex_conv2d.1} parent=11 // pred_check_branch
        %150 = sbr.rel (%p148) target = $region20
      $region19: #{complex_conv2d.1} parent=11 // pred_region
        _
      $region20: #{complex_conv2d.1} parent=11 // pred_fallthru
        _
    $region12: #{complex_conv2d.1} parent=5 // pred_fallthru
      _
    %p151 = scmp.lt.s32.totalorder %s10, 2
    // Predicated region
    $region21: #{complex_conv2d.1} parent=5 // pred_check
      %p152 = pneg %p151
    $region22: #{complex_conv2d.1} parent=5 // pred_check_branch
      %154 = sbr.rel (%p152) target = $region24
    $region23: #{complex_conv2d.1} parent=5 // pred_region
      // Predicated region
      $region25: #{complex_conv2d.1} parent=23 // pred_check
        %p155 = pneg %p30
      $region26: #{complex_conv2d.1} parent=23 // pred_check_branch
        %157 = sbr.rel (%p155) target = $region28
      $region27: #{complex_conv2d.1} parent=23 // pred_region
        %s158 = smul.u32 4, %s10
        %p159 = scmp.lt.s32.totalorder %s158, 7
        %s160 = scalar_select %p159, %s158, 7
        %s161 = smul.addr %s160, 3
        %s162 = smul.addr %s161, 4
        %s163 = scalar_lea.vmem %s0, %s162
        %s164 = smul.u32 4, %s10
      $region28: #{complex_conv2d.1} parent=23 // pred_fallthru
        _
      // Predicated region
      $region29: #{complex_conv2d.1} parent=23 // pred_check
        %p165 = pneg %p56
      $region30: #{complex_conv2d.1} parent=23 // pred_check_branch
        %167 = sbr.rel (%p165) target = $region32
      $region31: #{complex_conv2d.1} parent=23 // pred_region
        %s168 = smul.u32 4, %s10
        %p169 = scmp.lt.s32.totalorder %s168, 7
        %s170 = scalar_select %p169, %s168, 7
        %s171 = smul.addr %s170, 3
        %s172 = smul.addr %s171, 4
        %s173 = scalar_lea.vmem %s1, %s172
        %s174 = smul.u32 4, %s10
      $region32: #{complex_conv2d.1} parent=23 // pred_fallthru
        _
    $region24: #{complex_conv2d.1} parent=5 // pred_fallthru
      _
    %p175 = scmp.le.s32.totalorder 1, %s10
    %p176 = scmp.lt.s32.totalorder %s10, 3
    %p177 = pnand %p175, %p176
    %p178 = pneg %p177
    // Predicated region
    $region33: #{complex_conv2d.1} parent=5 // pred_check
      _
    $region34: #{complex_conv2d.1} parent=5 // pred_check_branch
      %180 = sbr.rel (%p177) target = $region36
    $region35: #{complex_conv2d.1} parent=5 // pred_region
      %s181 = ssub.s32 %s10, 1
      %s182 = smul.u32 4, %s15
      %p183 = scmp.lt.s32.totalorder %s182, 7
      %s184 = scalar_select %p183, %s182, 7
      %s185 = smul.addr %s184, 3
      %s186 = smul.addr %s185, 4
      %s187 = scalar_lea.vmem %s0, %s186
      %p188 = pneg %p36
      %p189 = pneg %p33
      %s190 = smul.u32 4, %s15
      %p191 = scmp.lt.s32.totalorder %s190, 7
      %s192 = scalar_select %p191, %s190, 7
      %s193 = smul.addr %s192, 3
      %s194 = smul.addr %s193, 4
      %s195 = scalar_lea.vmem %s1, %s194
      %p196 = pneg %p62
      %p197 = pneg %p59
      %p198 = pneg %p83
      %p199 = pneg %p80
      %p200 = pneg %p104
      %p201 = pneg %p101
      %p202 = pneg %p130
      %p203 = pneg %p127
      %s204 = smul.u32 4, %s15
      %p205 = scmp.lt.s32.totalorder %s204, 7
      %s206 = scalar_select %p205, %s204, 7
      %s207 = smul.addr %s206, 8
      %s208 = scalar_lea.vmem %s4, %s207
      %s209 = smul.u32 4, %s15
      %p210 = scmp.lt.s32.totalorder %s209, 7
      %s211 = scalar_select %p210, %s209, 7
      %s212 = smul.addr %s211, 3
      %s213 = smul.addr %s212, 4
      %s214 = scalar_lea.vmem %s0, %s213
      %s215 = smul.u32 4, %s15
      %s216 = smul.u32 4, %s15
      %p217 = scmp.lt.s32.totalorder %s216, 7
      %s218 = scalar_select %p217, %s216, 7
      %s219 = smul.addr %s218, 3
      %s220 = smul.addr %s219, 4
      %s221 = scalar_lea.vmem %s1, %s220
      %s222 = smul.u32 4, %s15
      %s223 = smul.u32 4, %s15
      %p224 = scmp.lt.s32.totalorder %s223, 7
      %s225 = scalar_select %p224, %s223, 7
      %s226 = smul.addr %s225, 8
      %s227 = scalar_lea.vmem %s4, %s226
      %s228 = smul.u32 4, %s15
      %v230 = vld [vmem:[%s214] sm:$0xff]
      %v231 = vld [vmem:[%s214 + $0x8] sm:$0xf]
      %v232 = vld [vmem:[%s214 + $0xc] sm:$0xff]
      %v233 = vld [vmem:[%s214 + $0x14] sm:$0xf]
      %v234 = vld [vmem:[%s214 + $0x18] sm:$0xff]
      %v235 = vld [vmem:[%s214 + $0x20] sm:$0xf]
      %v236 = vld [vmem:[%s214 + $0x24] sm:$0xff]
      %v237 = vld [vmem:[%s214 + $0x2c] sm:$0xf]
      %v238 = vld [vmem:[%s2] sm:$0xf]
      %v239 = vld [vmem:[%s2 + $0x4] sm:$0xf]
      %v240 = vld [vmem:[%s2 + $0x8] sm:$0xf]
      %v241 = vld [vmem:[%s2 + $0xc] sm:$0xf]
      %v242 = vld [vmem:[%s2 + $0x10] sm:$0xf]
      %v243 = vld [vmem:[%s2 + $0x14] sm:$0xf]
      %v244 = vld [vmem:[%s2 + $0x18] sm:$0xf]
      %v245 = vld [vmem:[%s2 + $0x1c] sm:$0xf]
      %v246 = vld [vmem:[%s2 + $0x20] sm:$0xf]
      %v247 = vld [vmem:[%s2 + $0x24] sm:$0xf]
      %v248 = vld [vmem:[%s2 + $0x28] sm:$0xf]
      %v249 = vld [vmem:[%s2 + $0x2c] sm:$0xf]
      %v250 = vld [vmem:[%s2 + $0x30] sm:$0xf]
      %v251 = vld [vmem:[%s2 + $0x34] sm:$0xf]
      %v252 = vld [vmem:[%s2 + $0x38] sm:$0xf]
      %v253 = vld [vmem:[%s2 + $0x3c] sm:$0xf]
      %v254 = vld [vmem:[%s2 + $0x40] sm:$0xf]
      %v255 = vld [vmem:[%s2 + $0x44] sm:$0xf]
      %v256 = vld [vmem:[%s2 + $0x48] sm:$0xf]
      %v257 = vld [vmem:[%s2 + $0x4c] sm:$0xf]
      %v258 = vld [vmem:[%s2 + $0x50] sm:$0xf]
      %v259 = vld [vmem:[%s2 + $0x54] sm:$0xf]
      %v260 = vld [vmem:[%s2 + $0x58] sm:$0xf]
      %v261 = vld [vmem:[%s2 + $0x5c] sm:$0xf]
      %v262 = vld [vmem:[%s2 + $0x60] sm:$0xf]
      %v263 = vld [vmem:[%s2 + $0x64] sm:$0xf]
      %v264 = vld [vmem:[%s2 + $0x68] sm:$0xf]
      %v265 = vld [vmem:[%s2 + $0x6c] sm:$0xf]
      %v266 = vld [vmem:[%s2 + $0x70] sm:$0xf]
      %v267 = vld [vmem:[%s2 + $0x74] sm:$0xf]
      %v268 = vld [vmem:[%s2 + $0x78] sm:$0xf]
      %v269 = vld [vmem:[%s2 + $0x7c] sm:$0xf]
      %v270 = vld [vmem:[%s2 + $0x80] sm:$0xf]
      %v271 = vld [vmem:[%s2 + $0x84] sm:$0xf]
      %v272 = vld [vmem:[%s2 + $0x88] sm:$0xf]
      %v273 = vld [vmem:[%s2 + $0x8c] sm:$0xf]
      %v274 = vld [vmem:[%s221] sm:$0xff]
      %v275 = vld [vmem:[%s221 + $0x8] sm:$0xf]
      %v276 = vld [vmem:[%s221 + $0xc] sm:$0xff]
      %v277 = vld [vmem:[%s221 + $0x14] sm:$0xf]
      %v278 = vld [vmem:[%s221 + $0x18] sm:$0xff]
      %v279 = vld [vmem:[%s221 + $0x20] sm:$0xf]
      %v280 = vld [vmem:[%s221 + $0x24] sm:$0xff]
      %v281 = vld [vmem:[%s221 + $0x2c] sm:$0xf]
      %v282 = vld [vmem:[%s3] sm:$0xf]
      %v283 = vld [vmem:[%s3 + $0x4] sm:$0xf]
      %v284 = vld [vmem:[%s3 + $0x8] sm:$0xf]
      %v285 = vld [vmem:[%s3 + $0xc] sm:$0xf]
      %v286 = vld [vmem:[%s3 + $0x10] sm:$0xf]
      %v287 = vld [vmem:[%s3 + $0x14] sm:$0xf]
      %v288 = vld [vmem:[%s3 + $0x18] sm:$0xf]
      %v289 = vld [vmem:[%s3 + $0x1c] sm:$0xf]
      %v290 = vld [vmem:[%s3 + $0x20] sm:$0xf]
      %v291 = vld [vmem:[%s3 + $0x24] sm:$0xf]
      %v292 = vld [vmem:[%s3 + $0x28] sm:$0xf]
      %v293 = vld [vmem:[%s3 + $0x2c] sm:$0xf]
      %v294 = vld [vmem:[%s3 + $0x30] sm:$0xf]
      %v295 = vld [vmem:[%s3 + $0x34] sm:$0xf]
      %v296 = vld [vmem:[%s3 + $0x38] sm:$0xf]
      %v297 = vld [vmem:[%s3 + $0x3c] sm:$0xf]
      %v298 = vld [vmem:[%s3 + $0x40] sm:$0xf]
      %v299 = vld [vmem:[%s3 + $0x44] sm:$0xf]
      %v300 = vld [vmem:[%s3 + $0x48] sm:$0xf]
      %v301 = vld [vmem:[%s3 + $0x4c] sm:$0xf]
      %v302 = vld [vmem:[%s3 + $0x50] sm:$0xf]
      %v303 = vld [vmem:[%s3 + $0x54] sm:$0xf]
      %v304 = vld [vmem:[%s3 + $0x58] sm:$0xf]
      %v305 = vld [vmem:[%s3 + $0x5c] sm:$0xf]
      %v306 = vld [vmem:[%s3 + $0x60] sm:$0xf]
      %v307 = vld [vmem:[%s3 + $0x64] sm:$0xf]
      %v308 = vld [vmem:[%s3 + $0x68] sm:$0xf]
      %v309 = vld [vmem:[%s3 + $0x6c] sm:$0xf]
      %v310 = vld [vmem:[%s3 + $0x70] sm:$0xf]
      %v311 = vld [vmem:[%s3 + $0x74] sm:$0xf]
      %v312 = vld [vmem:[%s3 + $0x78] sm:$0xf]
      %v313 = vld [vmem:[%s3 + $0x7c] sm:$0xf]
      %v314 = vld [vmem:[%s3 + $0x80] sm:$0xf]
      %v315 = vld [vmem:[%s3 + $0x84] sm:$0xf]
      %v316 = vld [vmem:[%s3 + $0x88] sm:$0xf]
      %v317 = vld [vmem:[%s3 + $0x8c] sm:$0xf]
      %v326 = vunpack.c.l.b16 %v274
      %v327 = vunpack.c.h.b16 %v274
      %v328 = vunpack.c.l.b16 %v275
      %v329 = vunpack.c.l.b16 %v276
      %v330 = vunpack.c.h.b16 %v276
      %v331 = vunpack.c.l.b16 %v277
      %v332 = vunpack.c.l.b16 %v278
      %v333 = vunpack.c.h.b16 %v278
      %v334 = vunpack.c.l.b16 %v279
      %v335 = vunpack.c.l.b16 %v280
      %v336 = vunpack.c.h.b16 %v280
      %v337 = vunpack.c.l.b16 %v281
      %v338 = vpack.c.b16 %v329, %v326
      %v339 = vpack.c.b16 %v330, %v327
      %v340 = vpack.c.b16 %v331, %v328
      %v341 = vpack.c.b16 %v335, %v332
      %v342 = vpack.c.b16 %v336, %v333
      %v343 = vpack.c.b16 %v337, %v334
      %v384 = vunpack.c.l.b16 %v282
      %v385 = vunpack.c.l.b16 %v283
      %v386 = vunpack.c.l.b16 %v284
      %v387 = vunpack.c.l.b16 %v285
      %v388 = vunpack.c.l.b16 %v286
      %v389 = vunpack.c.l.b16 %v287
      %v390 = vunpack.c.l.b16 %v288
      %v391 = vunpack.c.l.b16 %v289
      %v392 = vunpack.c.l.b16 %v290
      %v393 = vunpack.c.l.b16 %v291
      %v394 = vunpack.c.l.b16 %v292
      %v395 = vunpack.c.l.b16 %v293
      %v396 = vunpack.c.l.b16 %v294
      %v397 = vunpack.c.l.b16 %v295
      %v398 = vunpack.c.l.b16 %v296
      %v399 = vunpack.c.l.b16 %v297
      %v400 = vunpack.c.l.b16 %v298
      %v401 = vunpack.c.l.b16 %v299
      %v402 = vunpack.c.l.b16 %v300
      %v403 = vunpack.c.l.b16 %v301
      %v404 = vunpack.c.l.b16 %v302
      %v405 = vunpack.c.l.b16 %v303
      %v406 = vunpack.c.l.b16 %v304
      %v407 = vunpack.c.l.b16 %v305
      %v408 = vunpack.c.l.b16 %v306
      %v409 = vunpack.c.l.b16 %v307
      %v410 = vunpack.c.l.b16 %v308
      %v411 = vunpack.c.l.b16 %v309
      %v412 = vunpack.c.l.b16 %v310
      %v413 = vunpack.c.l.b16 %v311
      %v414 = vunpack.c.l.b16 %v312
      %v415 = vunpack.c.l.b16 %v313
      %v416 = vunpack.c.l.b16 %v314
      %v417 = vunpack.c.l.b16 %v315
      %v418 = vunpack.c.l.b16 %v316
      %v419 = vunpack.c.l.b16 %v317
      %v420 = vpack.c.b16 %v385, %v384
      %v421 = vpack.c.b16 %v387, %v386
      %v422 = vpack.c.b16 %v389, %v388
      %v423 = vpack.c.b16 %v391, %v390
      %v424 = vpack.c.b16 %v393, %v392
      %v425 = vpack.c.b16 %v395, %v394
      %v426 = vpack.c.b16 %v397, %v396
      %v427 = vpack.c.b16 %v399, %v398
      %v428 = vpack.c.b16 %v401, %v400
      %v429 = vpack.c.b16 %v403, %v402
      %v430 = vpack.c.b16 %v405, %v404
      %v431 = vpack.c.b16 %v407, %v406
      %v432 = vpack.c.b16 %v409, %v408
      %v433 = vpack.c.b16 %v411, %v410
      %v434 = vpack.c.b16 %v413, %v412
      %v435 = vpack.c.b16 %v415, %v414
      %v436 = vpack.c.b16 %v417, %v416
      %v437 = vpack.c.b16 %v419, %v418
      %vm456 = vcmask 261120
      %v458 = vsel %vm456, %v340, 0
      %v461 = vsel %vm456, %v343, 0
      %463 = vmatprep.subr.bf16.mxu0 0
      %464 = vmatpush1.bf16.msra.mxu0 %v427
      %465 = vmatprep.subr.bf16.mxu0 0
      %466 = vmatpush1.bf16.msra.mxu0 %v426
      %467 = vmatprep.subr.bf16.mxu0 0
      %468 = vmatpush1.bf16.msra.mxu0 %v425
      %469 = vmatprep.subr.bf16.mxu0 0
      %470 = vmatpush1.bf16.msra.mxu0 %v424
      %471 = vmatprep.subr.bf16.mxu0 0
      %472 = vmatpush1.bf16.msra.mxu0 %v423
      %473 = vmatprep.subr.bf16.mxu0 0
      %474 = vmatpush1.bf16.msra.mxu0 %v422
      %475 = vmatprep.subr.bf16.mxu0 0
      %476 = vmatpush1.bf16.msra.mxu0 %v421
      %477 = vmatprep.subr.bf16.mxu0 0
      %478 = vmatpush1.bf16.msra.mxu0 %v420
      %479 = vmatprep.subr.bf16.mxu0 0
      %480 = vmatpush2.bf16.msra.mxu0 %v435
      %481 = vmatprep.subr.bf16.mxu0 0
      %482 = vmatpush2.bf16.msra.mxu0 %v434
      %483 = vmatprep.subr.bf16.mxu0 0
      %484 = vmatpush2.bf16.msra.mxu0 %v433
      %485 = vmatprep.subr.bf16.mxu0 0
      %486 = vmatpush2.bf16.msra.mxu0 %v432
      %487 = vmatprep.subr.bf16.mxu0 0
      %488 = vmatpush2.bf16.msra.mxu0 %v431
      %489 = vmatprep.subr.bf16.mxu0 0
      %490 = vmatpush2.bf16.msra.mxu0 %v430
      %491 = vmatprep.subr.bf16.mxu0 0
      %492 = vmatpush2.bf16.msra.mxu0 %v429
      %493 = vmatprep.subr.bf16.mxu0 0
      %494 = vmatpush2.bf16.msra.mxu0 %v428
      %495 = vmatprep.mubr.bf16.mxu0 %v339
      %496 = vmatmul.mubr.bf16.gmra.mxu0 %v338
      %v497 = vpop.f32.mrf.mxu0
      %v498 = vadd.f32 0.0, %v497
      %v499 = vpop.f32.mrf.mxu0
      %v500 = vpop.f32.mrf.mxu0
      %v501 = vadd.f32 0.0, %v500
      %v502 = vpop.f32.mrf.mxu0
      %503 = vmatprep.mubr.bf16.mxu0 %v342
      %504 = vmatmul.mubr.bf16.gmra.mxu0 %v341
      %v505 = vpop.f32.mrf.mxu0
      %v506 = vadd.f32 0.0, %v505
      %v507 = vpop.f32.mrf.mxu0
      %v508 = vpop.f32.mrf.mxu0
      %v509 = vadd.f32 0.0, %v508
      %v510 = vpop.f32.mrf.mxu0
      %511 = vdwg.mxu0
      %512 = vmatprep.subr.bf16.mxu0 0
      %513 = vmatpush1.bf16.msra.mxu0 0
      %514 = vmatprep.subr.bf16.mxu0 0
      %515 = vmatpush1.bf16.msra.mxu0 0
      %516 = vmatprep.subr.bf16.mxu0 0
      %517 = vmatpush1.bf16.msra.mxu0 0
      %518 = vmatprep.subr.bf16.mxu0 0
      %519 = vmatpush1.bf16.msra.mxu0 0
      %520 = vmatprep.subr.bf16.mxu0 0
      %521 = vmatpush1.bf16.msra.mxu0 0
      %522 = vmatprep.subr.bf16.mxu0 0
      %523 = vmatpush1.bf16.msra.mxu0 0
      %524 = vmatprep.subr.bf16.mxu0 0
      %525 = vmatpush1.bf16.msra.mxu0 %v437
      %526 = vmatprep.subr.bf16.mxu0 0
      %527 = vmatpush1.bf16.msra.mxu0 %v436
      %528 = vmatprep.subr.bf16.mxu0 0
      %529 = vmatpush2.bf16.msra.mxu0 0
      %530 = vmatprep.subr.bf16.mxu0 0
      %531 = vmatpush2.bf16.msra.mxu0 0
      %532 = vmatprep.subr.bf16.mxu0 0
      %533 = vmatpush2.bf16.msra.mxu0 0
      %534 = vmatprep.subr.bf16.mxu0 0
      %535 = vmatpush2.bf16.msra.mxu0 0
      %536 = vmatprep.subr.bf16.mxu0 0
      %537 = vmatpush2.bf16.msra.mxu0 0
      %538 = vmatprep.subr.bf16.mxu0 0
      %539 = vmatpush2.bf16.msra.mxu0 0
      %540 = vmatprep.subr.bf16.mxu0 0
      %541 = vmatpush2.bf16.msra.mxu0 0
      %542 = vmatprep.subr.bf16.mxu0 0
      %543 = vmatpush2.bf16.msra.mxu0 0
      %544 = vmatprep.mubr.bf16.mxu0 0
      %545 = vmatmul.mubr.bf16.gmra.mxu0 %v458
      %v546 = vpop.f32.mrf.mxu0
      %v547 = vadd.f32 %v498, %v546
      %v548 = vpop.f32.mrf.mxu0
      %v549 = vpop.f32.mrf.mxu0
      %v550 = vadd.f32 %v501, %v549
      %v551 = vpop.f32.mrf.mxu0
      %552 = vmatprep.mubr.bf16.mxu0 0
      %553 = vmatmul.mubr.bf16.gmra.mxu0 %v461
      %v554 = vpop.f32.mrf.mxu0
      %v555 = vadd.f32 %v506, %v554
      %v556 = vpop.f32.mrf.mxu0
      %v557 = vpop.f32.mrf.mxu0
      %v558 = vadd.f32 %v509, %v557
      %v559 = vpop.f32.mrf.mxu0
      %560 = vdwg.mxu0
      %v569 = vunpack.c.l.b16 %v230
      %v570 = vunpack.c.h.b16 %v230
      %v571 = vunpack.c.l.b16 %v231
      %v572 = vunpack.c.l.b16 %v232
      %v573 = vunpack.c.h.b16 %v232
      %v574 = vunpack.c.l.b16 %v233
      %v575 = vunpack.c.l.b16 %v234
      %v576 = vunpack.c.h.b16 %v234
      %v577 = vunpack.c.l.b16 %v235
      %v578 = vunpack.c.l.b16 %v236
      %v579 = vunpack.c.h.b16 %v236
      %v580 = vunpack.c.l.b16 %v237
      %v581 = vpack.c.b16 %v572, %v569
      %v582 = vpack.c.b16 %v573, %v570
      %v583 = vpack.c.b16 %v574, %v571
      %v584 = vpack.c.b16 %v578, %v575
      %v585 = vpack.c.b16 %v579, %v576
      %v586 = vpack.c.b16 %v580, %v577
      %v627 = vunpack.c.l.b16 %v238
      %v628 = vunpack.c.l.b16 %v239
      %v629 = vunpack.c.l.b16 %v240
      %v630 = vunpack.c.l.b16 %v241
      %v631 = vunpack.c.l.b16 %v242
      %v632 = vunpack.c.l.b16 %v243
      %v633 = vunpack.c.l.b16 %v244
      %v634 = vunpack.c.l.b16 %v245
      %v635 = vunpack.c.l.b16 %v246
      %v636 = vunpack.c.l.b16 %v247
      %v637 = vunpack.c.l.b16 %v248
      %v638 = vunpack.c.l.b16 %v249
      %v639 = vunpack.c.l.b16 %v250
      %v640 = vunpack.c.l.b16 %v251
      %v641 = vunpack.c.l.b16 %v252
      %v642 = vunpack.c.l.b16 %v253
      %v643 = vunpack.c.l.b16 %v254
      %v644 = vunpack.c.l.b16 %v255
      %v645 = vunpack.c.l.b16 %v256
      %v646 = vunpack.c.l.b16 %v257
      %v647 = vunpack.c.l.b16 %v258
      %v648 = vunpack.c.l.b16 %v259
      %v649 = vunpack.c.l.b16 %v260
      %v650 = vunpack.c.l.b16 %v261
      %v651 = vunpack.c.l.b16 %v262
      %v652 = vunpack.c.l.b16 %v263
      %v653 = vunpack.c.l.b16 %v264
      %v654 = vunpack.c.l.b16 %v265
      %v655 = vunpack.c.l.b16 %v266
      %v656 = vunpack.c.l.b16 %v267
      %v657 = vunpack.c.l.b16 %v268
      %v658 = vunpack.c.l.b16 %v269
      %v659 = vunpack.c.l.b16 %v270
      %v660 = vunpack.c.l.b16 %v271
      %v661 = vunpack.c.l.b16 %v272
      %v662 = vunpack.c.l.b16 %v273
      %v663 = vpack.c.b16 %v628, %v627
      %v664 = vpack.c.b16 %v630, %v629
      %v665 = vpack.c.b16 %v632, %v631
      %v666 = vpack.c.b16 %v634, %v633
      %v667 = vpack.c.b16 %v636, %v635
      %v668 = vpack.c.b16 %v638, %v637
      %v669 = vpack.c.b16 %v640, %v639
      %v670 = vpack.c.b16 %v642, %v641
      %v671 = vpack.c.b16 %v644, %v643
      %v672 = vpack.c.b16 %v646, %v645
      %v673 = vpack.c.b16 %v648, %v647
      %v674 = vpack.c.b16 %v650, %v649
      %v675 = vpack.c.b16 %v652, %v651
      %v676 = vpack.c.b16 %v654, %v653
      %v677 = vpack.c.b16 %v656, %v655
      %v678 = vpack.c.b16 %v658, %v657
      %v679 = vpack.c.b16 %v660, %v659
      %v680 = vpack.c.b16 %v662, %v661
      %v700 = vsel %vm456, %v583, 0
      %v703 = vsel %vm456, %v586, 0
      %705 = vmatprep.subr.bf16.mxu0 0
      %706 = vmatpush1.bf16.msra.mxu0 %v670
      %707 = vmatprep.subr.bf16.mxu0 0
      %708 = vmatpush1.bf16.msra.mxu0 %v669
      %709 = vmatprep.subr.bf16.mxu0 0
      %710 = vmatpush1.bf16.msra.mxu0 %v668
      %711 = vmatprep.subr.bf16.mxu0 0
      %712 = vmatpush1.bf16.msra.mxu0 %v667
      %713 = vmatprep.subr.bf16.mxu0 0
      %714 = vmatpush1.bf16.msra.mxu0 %v666
      %715 = vmatprep.subr.bf16.mxu0 0
      %716 = vmatpush1.bf16.msra.mxu0 %v665
      %717 = vmatprep.subr.bf16.mxu0 0
      %718 = vmatpush1.bf16.msra.mxu0 %v664
      %719 = vmatprep.subr.bf16.mxu0 0
      %720 = vmatpush1.bf16.msra.mxu0 %v663
      %721 = vmatprep.subr.bf16.mxu0 0
      %722 = vmatpush2.bf16.msra.mxu0 %v678
      %723 = vmatprep.subr.bf16.mxu0 0
      %724 = vmatpush2.bf16.msra.mxu0 %v677
      %725 = vmatprep.subr.bf16.mxu0 0
      %726 = vmatpush2.bf16.msra.mxu0 %v676
      %727 = vmatprep.subr.bf16.mxu0 0
      %728 = vmatpush2.bf16.msra.mxu0 %v675
      %729 = vmatprep.subr.bf16.mxu0 0
      %730 = vmatpush2.bf16.msra.mxu0 %v674
      %731 = vmatprep.subr.bf16.mxu0 0
      %732 = vmatpush2.bf16.msra.mxu0 %v673
      %733 = vmatprep.subr.bf16.mxu0 0
      %734 = vmatpush2.bf16.msra.mxu0 %v672
      %735 = vmatprep.subr.bf16.mxu0 0
      %736 = vmatpush2.bf16.msra.mxu0 %v671
      %737 = vmatprep.mubr.bf16.mxu0 %v582
      %738 = vmatmul.mubr.bf16.gmra.mxu0 %v581
      %v739 = vpop.f32.mrf.mxu0
      %v740 = vadd.f32 %v547, %v739
      %v741 = vpop.f32.mrf.mxu0
      %v742 = vpop.f32.mrf.mxu0
      %v743 = vadd.f32 %v550, %v742
      %v744 = vpop.f32.mrf.mxu0
      %745 = vmatprep.mubr.bf16.mxu0 %v585
      %746 = vmatmul.mubr.bf16.gmra.mxu0 %v584
      %v747 = vpop.f32.mrf.mxu0
      %v748 = vadd.f32 %v555, %v747
      %v749 = vpop.f32.mrf.mxu0
      %v750 = vpop.f32.mrf.mxu0
      %v751 = vadd.f32 %v558, %v750
      %v752 = vpop.f32.mrf.mxu0
      %753 = vdwg.mxu0
      %754 = vmatprep.subr.bf16.mxu0 0
      %755 = vmatpush1.bf16.msra.mxu0 0
      %756 = vmatprep.subr.bf16.mxu0 0
      %757 = vmatpush1.bf16.msra.mxu0 0
      %758 = vmatprep.subr.bf16.mxu0 0
      %759 = vmatpush1.bf16.msra.mxu0 0
      %760 = vmatprep.subr.bf16.mxu0 0
      %761 = vmatpush1.bf16.msra.mxu0 0
      %762 = vmatprep.subr.bf16.mxu0 0
      %763 = vmatpush1.bf16.msra.mxu0 0
      %764 = vmatprep.subr.bf16.mxu0 0
      %765 = vmatpush1.bf16.msra.mxu0 0
      %766 = vmatprep.subr.bf16.mxu0 0
      %767 = vmatpush1.bf16.msra.mxu0 %v680
      %768 = vmatprep.subr.bf16.mxu0 0
      %769 = vmatpush1.bf16.msra.mxu0 %v679
      %770 = vmatprep.subr.bf16.mxu0 0
      %771 = vmatpush2.bf16.msra.mxu0 0
      %772 = vmatprep.subr.bf16.mxu0 0
      %773 = vmatpush2.bf16.msra.mxu0 0
      %774 = vmatprep.subr.bf16.mxu0 0
      %775 = vmatpush2.bf16.msra.mxu0 0
      %776 = vmatprep.subr.bf16.mxu0 0
      %777 = vmatpush2.bf16.msra.mxu0 0
      %778 = vmatprep.subr.bf16.mxu0 0
      %779 = vmatpush2.bf16.msra.mxu0 0
      %780 = vmatprep.subr.bf16.mxu0 0
      %781 = vmatpush2.bf16.msra.mxu0 0
      %782 = vmatprep.subr.bf16.mxu0 0
      %783 = vmatpush2.bf16.msra.mxu0 0
      %784 = vmatprep.subr.bf16.mxu0 0
      %785 = vmatpush2.bf16.msra.mxu0 0
      %786 = vmatprep.mubr.bf16.mxu0 0
      %787 = vmatmul.mubr.bf16.gmra.mxu0 %v700
      %v788 = vpop.f32.mrf.mxu0
      %v789 = vadd.f32 %v740, %v788
      %v790 = vpop.f32.mrf.mxu0
      %v791 = vpop.f32.mrf.mxu0
      %v792 = vadd.f32 %v743, %v791
      %v793 = vpop.f32.mrf.mxu0
      %794 = vmatprep.mubr.bf16.mxu0 0
      %795 = vmatmul.mubr.bf16.gmra.mxu0 %v703
      %v796 = vpop.f32.mrf.mxu0
      %v797 = vadd.f32 %v748, %v796
      %v798 = vpop.f32.mrf.mxu0
      %v799 = vpop.f32.mrf.mxu0
      %v800 = vadd.f32 %v751, %v799
      %v801 = vpop.f32.mrf.mxu0
      %802 = vdwg.mxu0
      %803 = vst [vmem:[%s227] sm:$0xff] %v789
      %804 = vst [vmem:[%s227 + $0x8] sm:$0xff] %v792
      %805 = vst [vmem:[%s227 + $0x10] sm:$0xff] %v797
      %806 = vst [vmem:[%s227 + $0x18] sm:$0xff] %v800
      %s807 = smul.u32 4, %s15
      %p808 = scmp.lt.s32.totalorder %s807, 7
      %s809 = scalar_select %p808, %s807, 7
      %s810 = smul.addr %s809, 8
      %s811 = scalar_lea.vmem %s4, %s810
      // Predicated region
      $region37: #{complex_conv2d.1} parent=35 // pred_check
        %p812 = pneg %p127
      $region38: #{complex_conv2d.1} parent=35 // pred_check_branch
        %814 = sbr.rel (%p812) target = $region40
      $region39: #{complex_conv2d.1} parent=35 // pred_region
        %s815 = smul.u32 4, %s15
      $region40: #{complex_conv2d.1} parent=35 // pred_fallthru
        _
    $region36: #{complex_conv2d.1} parent=5 // pred_fallthru
      _
    %p816 = scmp.le.s32.totalorder 2, %s10
    // Predicated region
    $region41: #{complex_conv2d.1} parent=5 // pred_check
      %p817 = pneg %p816
    $region42: #{complex_conv2d.1} parent=5 // pred_check_branch
      %819 = sbr.rel (%p817) target = $region44
    $region43: #{complex_conv2d.1} parent=5 // pred_region
      %s820 = ssub.s32 %s10, 2
      // Predicated region
      $region45: #{complex_conv2d.1} parent=43 // pred_check
        %p821 = pneg %p133
      $region46: #{complex_conv2d.1} parent=43 // pred_check_branch
        %823 = sbr.rel (%p821) target = $region48
      $region47: #{complex_conv2d.1} parent=43 // pred_region
        %s824 = smul.u32 4, %s16
        %p825 = scmp.lt.s32.totalorder %s824, 7
        %s826 = scalar_select %p825, %s824, 7
        %s827 = smul.addr %s826, 8
        %s828 = scalar_lea.vmem %s4, %s827
      $region48: #{complex_conv2d.1} parent=43 // pred_fallthru
        _
    $region44: #{complex_conv2d.1} parent=5 // pred_fallthru
      _
  $region6: #{complex_conv2d.1} parent=0 // loop_footer
    %s14 = sadd.s32 1, %s10
  $region7: #{complex_conv2d.1} parent=0 // loop_footer_branch
    %9 = sbr.rel target = $region3
  $region8: #{complex_conv2d.1} parent=0 // loop_exit
    _

// kernel: custom-call.2
$region0: #{custom-call.2}
  %s0 = inlined_call_operand.vmem [shape: f32[2,8,16,16], index: 0, kind: input, shape index: {}]
  %s1 = inlined_call_operand.vmem [shape: f32[2,8,16,16], index: 1, kind: input, shape index: {}]
  %s2 = inlined_call_operand.vmem [shape: c64[2,8,16,16], index: 2, kind: output, shape index: {}]
  %s4 = scalar_lea.vmem %s2, 256
  %v5 = vld [vmem:[%s0] sm:$0xff]
  %6 = vst [vmem:[%s2] sm:$0xff] %v5
  %s7 = scalar_lea.vmem %s2, 8
  %s8 = scalar_lea.vmem %s0, 8
  %v9 = vld [vmem:[%s8] sm:$0xff]
  %10 = vst [vmem:[%s7] sm:$0xff] %v9
  %s11 = scalar_lea.vmem %s2, 16
  %s12 = scalar_lea.vmem %s0, 16
  %v13 = vld [vmem:[%s12] sm:$0xff]
  %14 = vst [vmem:[%s11] sm:$0xff] %v13
  %s15 = scalar_lea.vmem %s2, 24
  %s16 = scalar_lea.vmem %s0, 24
  %v17 = vld [vmem:[%s16] sm:$0xff]
  %18 = vst [vmem:[%s15] sm:$0xff] %v17
  %s19 = scalar_lea.vmem %s2, 32
  %s20 = scalar_lea.vmem %s0, 32
  %v21 = vld [vmem:[%s20] sm:$0xff]
  %22 = vst [vmem:[%s19] sm:$0xff] %v21
  %s23 = scalar_lea.vmem %s2, 40
  %s24 = scalar_lea.vmem %s0, 40
  %v25 = vld [vmem:[%s24] sm:$0xff]
  %26 = vst [vmem:[%s23] sm:$0xff] %v25
  %s27 = scalar_lea.vmem %s2, 48
  %s28 = scalar_lea.vmem %s0, 48
  %v29 = vld [vmem:[%s28] sm:$0xff]
  %30 = vst [vmem:[%s27] sm:$0xff] %v29
  %s31 = scalar_lea.vmem %s2, 56
  %s32 = scalar_lea.vmem %s0, 56
  %v33 = vld [vmem:[%s32] sm:$0xff]
  %34 = vst [vmem:[%s31] sm:$0xff] %v33
  %s35 = scalar_lea.vmem %s2, 64
  %s36 = scalar_lea.vmem %s0, 64
  %v37 = vld [vmem:[%s36] sm:$0xff]
  %38 = vst [vmem:[%s35] sm:$0xff] %v37
  %s39 = scalar_lea.vmem %s2, 72
  %s40 = scalar_lea.vmem %s0, 72
  %v41 = vld [vmem:[%s40] sm:$0xff]
  %42 = vst [vmem:[%s39] sm:$0xff] %v41
  %s43 = scalar_lea.vmem %s2, 80
  %s44 = scalar_lea.vmem %s0, 80
  %v45 = vld [vmem:[%s44] sm:$0xff]
  %46 = vst [vmem:[%s43] sm:$0xff] %v45
  %s47 = scalar_lea.vmem %s2, 88
  %s48 = scalar_lea.vmem %s0, 88
  %v49 = vld [vmem:[%s48] sm:$0xff]
  %50 = vst [vmem:[%s47] sm:$0xff] %v49
  %s51 = scalar_lea.vmem %s2, 96
  %s52 = scalar_lea.vmem %s0, 96
  %v53 = vld [vmem:[%s52] sm:$0xff]
  %54 = vst [vmem:[%s51] sm:$0xff] %v53
  %s55 = scalar_lea.vmem %s2, 104
  %s56 = scalar_lea.vmem %s0, 104
  %v57 = vld [vmem:[%s56] sm:$0xff]
  %58 = vst [vmem:[%s55] sm:$0xff] %v57
  %s59 = scalar_lea.vmem %s2, 112
  %s60 = scalar_lea.vmem %s0, 112
  %v61 = vld [vmem:[%s60] sm:$0xff]
  %62 = vst [vmem:[%s59] sm:$0xff] %v61
  %s63 = scalar_lea.vmem %s2, 120
  %s64 = scalar_lea.vmem %s0, 120
  %v65 = vld [vmem:[%s64] sm:$0xff]
  %66 = vst [vmem:[%s63] sm:$0xff] %v65
  %s67 = scalar_lea.vmem %s2, 128
  %s68 = scalar_lea.vmem %s0, 128
  %v69 = vld [vmem:[%s68] sm:$0xff]
  %70 = vst [vmem:[%s67] sm:$0xff] %v69
  %s71 = scalar_lea.vmem %s2, 136
  %s72 = scalar_lea.vmem %s0, 136
  %v73 = vld [vmem:[%s72] sm:$0xff]
  %74 = vst [vmem:[%s71] sm:$0xff] %v73
  %s75 = scalar_lea.vmem %s2, 144
  %s76 = scalar_lea.vmem %s0, 144
  %v77 = vld [vmem:[%s76] sm:$0xff]
  %78 = vst [vmem:[%s75] sm:$0xff] %v77
  %s79 = scalar_lea.vmem %s2, 152
  %s80 = scalar_lea.vmem %s0, 152
  %v81 = vld [vmem:[%s80] sm:$0xff]
  %82 = vst [vmem:[%s79] sm:$0xff] %v81
  %s83 = scalar_lea.vmem %s2, 160
  %s84 = scalar_lea.vmem %s0, 160
  %v85 = vld [vmem:[%s84] sm:$0xff]
  %86 = vst [vmem:[%s83] sm:$0xff] %v85
  %s87 = scalar_lea.vmem %s2, 168
  %s88 = scalar_lea.vmem %s0, 168
  %v89 = vld [vmem:[%s88] sm:$0xff]
  %90 = vst [vmem:[%s87] sm:$0xff] %v89
  %s91 = scalar_lea.vmem %s2, 176
  %s92 = scalar_lea.vmem %s0, 176
  %v93 = vld [vmem:[%s92] sm:$0xff]
  %94 = vst [vmem:[%s91] sm:$0xff] %v93
  %s95 = scalar_lea.vmem %s2, 184
  %s96 = scalar_lea.vmem %s0, 184
  %v97 = vld [vmem:[%s96] sm:$0xff]
  %98 = vst [vmem:[%s95] sm:$0xff] %v97
  %s99 = scalar_lea.vmem %s2, 192
  %s100 = scalar_lea.vmem %s0, 192
  %v101 = vld [vmem:[%s100] sm:$0xff]
  %102 = vst [vmem:[%s99] sm:$0xff] %v101
  %s103 = scalar_lea.vmem %s2, 200
  %s104 = scalar_lea.vmem %s0, 200
  %v105 = vld [vmem:[%s104] sm:$0xff]
  %106 = vst [vmem:[%s103] sm:$0xff] %v105
  %s107 = scalar_lea.vmem %s2, 208
  %s108 = scalar_lea.vmem %s0, 208
  %v109 = vld [vmem:[%s108] sm:$0xff]
  %110 = vst [vmem:[%s107] sm:$0xff] %v109
  %s111 = scalar_lea.vmem %s2, 216
  %s112 = scalar_lea.vmem %s0, 216
  %v113 = vld [vmem:[%s112] sm:$0xff]
  %114 = vst [vmem:[%s111] sm:$0xff] %v113
  %s115 = scalar_lea.vmem %s2, 224
  %s116 = scalar_lea.vmem %s0, 224
  %v117 = vld [vmem:[%s116] sm:$0xff]
  %118 = vst [vmem:[%s115] sm:$0xff] %v117
  %s119 = scalar_lea.vmem %s2, 232
  %s120 = scalar_lea.vmem %s0, 232
  %v121 = vld [vmem:[%s120] sm:$0xff]
  %122 = vst [vmem:[%s119] sm:$0xff] %v121
  %s123 = scalar_lea.vmem %s2, 240
  %s124 = scalar_lea.vmem %s0, 240
  %v125 = vld [vmem:[%s124] sm:$0xff]
  %126 = vst [vmem:[%s123] sm:$0xff] %v125
  %s127 = scalar_lea.vmem %s2, 248
  %s128 = scalar_lea.vmem %s0, 248
  %v129 = vld [vmem:[%s128] sm:$0xff]
  %130 = vst [vmem:[%s127] sm:$0xff] %v129
  %v131 = vld [vmem:[%s1] sm:$0xff]
  %132 = vst [vmem:[%s4] sm:$0xff] %v131
  %s133 = scalar_lea.vmem %s4, 8
  %s134 = scalar_lea.vmem %s1, 8
  %v135 = vld [vmem:[%s134] sm:$0xff]
  %136 = vst [vmem:[%s133] sm:$0xff] %v135
  %s137 = scalar_lea.vmem %s4, 16
  %s138 = scalar_lea.vmem %s1, 16
  %v139 = vld [vmem:[%s138] sm:$0xff]
  %140 = vst [vmem:[%s137] sm:$0xff] %v139
  %s141 = scalar_lea.vmem %s4, 24
  %s142 = scalar_lea.vmem %s1, 24
  %v143 = vld [vmem:[%s142] sm:$0xff]
  %144 = vst [vmem:[%s141] sm:$0xff] %v143
  %s145 = scalar_lea.vmem %s4, 32
  %s146 = scalar_lea.vmem %s1, 32
  %v147 = vld [vmem:[%s146] sm:$0xff]
  %148 = vst [vmem:[%s145] sm:$0xff] %v147
  %s149 = scalar_lea.vmem %s4, 40
  %s150 = scalar_lea.vmem %s1, 40
  %v151 = vld [vmem:[%s150] sm:$0xff]
  %152 = vst [vmem:[%s149] sm:$0xff] %v151
  %s153 = scalar_lea.vmem %s4, 48
  %s154 = scalar_lea.vmem %s1, 48
  %v155 = vld [vmem:[%s154] sm:$0xff]
  %156 = vst [vmem:[%s153] sm:$0xff] %v155
  %s157 = scalar_lea.vmem %s4, 56
  %s158 = scalar_lea.vmem %s1, 56
  %v159 = vld [vmem:[%s158] sm:$0xff]
  %160 = vst [vmem:[%s157] sm:$0xff] %v159
  %s161 = scalar_lea.vmem %s4, 64
  %s162 = scalar_lea.vmem %s1, 64
  %v163 = vld [vmem:[%s162] sm:$0xff]
  %164 = vst [vmem:[%s161] sm:$0xff] %v163
  %s165 = scalar_lea.vmem %s4, 72
  %s166 = scalar_lea.vmem %s1, 72
  %v167 = vld [vmem:[%s166] sm:$0xff]
  %168 = vst [vmem:[%s165] sm:$0xff] %v167
  %s169 = scalar_lea.vmem %s4, 80
  %s170 = scalar_lea.vmem %s1, 80
  %v171 = vld [vmem:[%s170] sm:$0xff]
  %172 = vst [vmem:[%s169] sm:$0xff] %v171
  %s173 = scalar_lea.vmem %s4, 88
  %s174 = scalar_lea.vmem %s1, 88
  %v175 = vld [vmem:[%s174] sm:$0xff]
  %176 = vst [vmem:[%s173] sm:$0xff] %v175
  %s177 = scalar_lea.vmem %s4, 96
  %s178 = scalar_lea.vmem %s1, 96
  %v179 = vld [vmem:[%s178] sm:$0xff]
  %180 = vst [vmem:[%s177] sm:$0xff] %v179
  %s181 = scalar_lea.vmem %s4, 104
  %s182 = scalar_lea.vmem %s1, 104
  %v183 = vld [vmem:[%s182] sm:$0xff]
  %184 = vst [vmem:[%s181] sm:$0xff] %v183
  %s185 = scalar_lea.vmem %s4, 112
  %s186 = scalar_lea.vmem %s1, 112
  %v187 = vld [vmem:[%s186] sm:$0xff]
  %188 = vst [vmem:[%s185] sm:$0xff] %v187
  %s189 = scalar_lea.vmem %s4, 120
  %s190 = scalar_lea.vmem %s1, 120
  %v191 = vld [vmem:[%s190] sm:$0xff]
  %192 = vst [vmem:[%s189] sm:$0xff] %v191
  %s193 = scalar_lea.vmem %s4, 128
  %s194 = scalar_lea.vmem %s1, 128
  %v195 = vld [vmem:[%s194] sm:$0xff]
  %196 = vst [vmem:[%s193] sm:$0xff] %v195
  %s197 = scalar_lea.vmem %s4, 136
  %s198 = scalar_lea.vmem %s1, 136
  %v199 = vld [vmem:[%s198] sm:$0xff]
  %200 = vst [vmem:[%s197] sm:$0xff] %v199
  %s201 = scalar_lea.vmem %s4, 144
  %s202 = scalar_lea.vmem %s1, 144
  %v203 = vld [vmem:[%s202] sm:$0xff]
  %204 = vst [vmem:[%s201] sm:$0xff] %v203
  %s205 = scalar_lea.vmem %s4, 152
  %s206 = scalar_lea.vmem %s1, 152
  %v207 = vld [vmem:[%s206] sm:$0xff]
  %208 = vst [vmem:[%s205] sm:$0xff] %v207
  %s209 = scalar_lea.vmem %s4, 160
  %s210 = scalar_lea.vmem %s1, 160
  %v211 = vld [vmem:[%s210] sm:$0xff]
  %212 = vst [vmem:[%s209] sm:$0xff] %v211
  %s213 = scalar_lea.vmem %s4, 168
  %s214 = scalar_lea.vmem %s1, 168
  %v215 = vld [vmem:[%s214] sm:$0xff]
  %216 = vst [vmem:[%s213] sm:$0xff] %v215
  %s217 = scalar_lea.vmem %s4, 176
  %s218 = scalar_lea.vmem %s1, 176
  %v219 = vld [vmem:[%s218] sm:$0xff]
  %220 = vst [vmem:[%s217] sm:$0xff] %v219
  %s221 = scalar_lea.vmem %s4, 184
  %s222 = scalar_lea.vmem %s1, 184
  %v223 = vld [vmem:[%s222] sm:$0xff]
  %224 = vst [vmem:[%s221] sm:$0xff] %v223
  %s225 = scalar_lea.vmem %s4, 192
  %s226 = scalar_lea.vmem %s1, 192
  %v227 = vld [vmem:[%s226] sm:$0xff]
  %228 = vst [vmem:[%s225] sm:$0xff] %v227
  %s229 = scalar_lea.vmem %s4, 200
  %s230 = scalar_lea.vmem %s1, 200
  %v231 = vld [vmem:[%s230] sm:$0xff]
  %232 = vst [vmem:[%s229] sm:$0xff] %v231
  %s233 = scalar_lea.vmem %s4, 208
  %s234 = scalar_lea.vmem %s1, 208
  %v235 = vld [vmem:[%s234] sm:$0xff]
  %236 = vst [vmem:[%s233] sm:$0xff] %v235
  %s237 = scalar_lea.vmem %s4, 216
  %s238 = scalar_lea.vmem %s1, 216
  %v239 = vld [vmem:[%s238] sm:$0xff]
  %240 = vst [vmem:[%s237] sm:$0xff] %v239
  %s241 = scalar_lea.vmem %s4, 224
  %s242 = scalar_lea.vmem %s1, 224
  %v243 = vld [vmem:[%s242] sm:$0xff]
  %244 = vst [vmem:[%s241] sm:$0xff] %v243
  %s245 = scalar_lea.vmem %s4, 232
  %s246 = scalar_lea.vmem %s1, 232
  %v247 = vld [vmem:[%s246] sm:$0xff]
  %248 = vst [vmem:[%s245] sm:$0xff] %v247
  %s249 = scalar_lea.vmem %s4, 240
  %s250 = scalar_lea.vmem %s1, 240
  %v251 = vld [vmem:[%s250] sm:$0xff]
  %252 = vst [vmem:[%s249] sm:$0xff] %v251
  %s253 = scalar_lea.vmem %s4, 248
  %s254 = scalar_lea.vmem %s1, 248
  %v255 = vld [vmem:[%s254] sm:$0xff]
  %256 = vst [vmem:[%s253] sm:$0xff] %v255

</llo_original>
